<compile_context>
chip_gen: v5e
topology: v5e:2x2
jax: 0.10.0
libtpu: 0.0.40
codegen_flags: <defaults>
</compile_context>

<pallas_src>
import jax
import jax.numpy as jnp
from jax.experimental import pallas as pl
from jax.experimental.pallas import tpu as pltpu


# ------------------------------- kernels -----------------------------------


def _cls_head_kernel_single_k(x_ref, w_ref, b_ref, o_ref):
    # x_ref: (tm, K) CLS activations, w_ref: (tn, K) weight in stored layout,
    # b_ref: (1, tn) f32 bias, o_ref: (tm, tn) output.
    acc = jax.lax.dot_general(
        x_ref[...], w_ref[...],
        dimension_numbers=(((1,), (1,)), ((), ())),
        preferred_element_type=jnp.float32,
    )
    o_ref[...] = (acc + b_ref[...]).astype(o_ref.dtype)


def _cls_head_kernel_multi_k(x_ref, w_ref, b_ref, o_ref, acc_ref):
    # Same as above but with a K reduction axis and a resident f32 accumulator.
    k = pl.program_id(2)

    @pl.when(k == 0)
    def _init():
        acc_ref[...] = jnp.zeros_like(acc_ref)

    acc_ref[...] += jax.lax.dot_general(
        x_ref[...], w_ref[...],
        dimension_numbers=(((1,), (1,)), ((), ())),
        preferred_element_type=jnp.float32,
    )

    @pl.when(k == pl.num_programs(2) - 1)
    def _finalize():
        o_ref[...] = (acc_ref[...] + b_ref[...]).astype(o_ref.dtype)


# ------------------------------ tiling logic --------------------------------


def _round_up(a, m):
    return (a + m - 1) // m * m


def _vmem_budget():
    """(tile working-set budget, vmem_limit_bytes, dual_tensorcore) per gen."""
    try:
        kind = jax.devices()[0].device_kind.lower()
    except Exception:
        kind = ""
    if "7" in kind:
        # v7x: 64 MiB physical VMEM per TensorCore, 2 TCs per chip.
        return 36 << 20, 48 << 20, True
    if ("v6" in kind) or ("v5" in kind) or ("v4" in kind):
        # 128 MiB physical VMEM; raise the scoped default generously.
        return 72 << 20, 100 << 20, False
    # Unknown backend: conservative numbers that are safe everywhere.
    return 36 << 20, 48 << 20, False


def _choose_tiles(B, OUT, D, in_itemsize, out_itemsize, budget, dual_tc):
    """Returns (tm, tn, tk, needs_k_pad)."""
    # Batch tile: full batch when small (no padding, block == full dim is legal
    # for any B), otherwise a fixed 256-row tile with a ragged last block.
    tm = B if B <= 256 else 256

    # OUT tile: full dim when moderate (lane-dense full-row stores, no pad),
    # otherwise a 128-multiple with a ragged last block.
    tn = OUT if OUT <= 1024 else 512

    # v7x: make sure at least two blocks exist on a "parallel" axis so the
    # second TensorCore is not idle.
    if dual_tc and (pl.cdiv(B, tm) * pl.cdiv(OUT, tn)) < 2 and OUT >= 256:
        tn = _round_up(pl.cdiv(OUT, 2), 128)

    # K tile: prefer a single full-D tile; otherwise the largest 128-multiple
    # divisor of D that fits the VMEM budget; otherwise pad K (rare fallback).
    fixed = tm * tn * (4 + out_itemsize)              # f32 acc + output tile
    avail = max(budget - 2 * fixed, 1 << 20)
    tk_max = max(128, avail // (2 * (tm + tn) * in_itemsize))
    if D <= tk_max:
        return tm, tn, D, False
    cand = (min(tk_max, D) // 128) * 128
    while cand >= 128:
        if D % cand == 0:
            return tm, tn, cand, False
        cand -= 128
    tk = max(min((tk_max // 128) * 128, 2048), 128)
    return tm, tn, tk, True


# ------------------------------- wrapper ------------------------------------


def prepare_params(weight, bias, compute_dtype=jnp.bfloat16):
    """One-time parameter conversion (call at load time, NOT per forward).

    Storing the weight persistently in bf16 halves the dominant weight-DMA
    traffic on v5e/v6e/v7x; the kernel accumulates in f32 regardless.
    """
    return weight.astype(compute_dtype), bias.astype(jnp.float32)


def classification_head(x, weight, bias, *, compute_dtype=None,
                        tm=None, tn=None, tk=None):
    """x: (B, S, D), weight: (OUT, D), bias: (OUT,) -> (B, OUT) in x.dtype."""
    B, S, D = x.shape
    OUT, D_w = weight.shape
    assert D == D_w, "weight must be (output_dim, d_model)"
    out_dtype = x.dtype

    # Only the CLS token ever reaches the kernel: B*D HBM traffic, not B*S*D.
    x0 = x[:, 0, :]

    if compute_dtype is not None:
        if x0.dtype != compute_dtype:
            x0 = x0.astype(compute_dtype)            # tiny (B, D) cast
        if weight.dtype != compute_dtype:
            # TODO(synk): convert weights once via prepare_params() at load
            # time; a per-call cast here re-streams the weight through HBM.
            weight = weight.astype(compute_dtype)
    bias_2d = bias.astype(jnp.float32).reshape(1, OUT)

    budget, vmem_limit, dual_tc = _vmem_budget()
    a_tm, a_tn, a_tk, pad_k = _choose_tiles(
        B, OUT, D,
        in_itemsize=jnp.dtype(x0.dtype).itemsize,
        out_itemsize=jnp.dtype(out_dtype).itemsize,
        budget=budget, dual_tc=dual_tc)
    tm = a_tm if tm is None else min(tm, B)
    tn = a_tn if tn is None else tn
    tk = a_tk if tk is None else tk

    Dp = D
    if pad_k or (tk != D and D % tk != 0):
        # Rare fallback: zero-pad K so every K tile is fully valid (zeros
        # contribute nothing to the accumulation).
        Dp = _round_up(D, tk)
        x0 = jnp.pad(x0, ((0, 0), (0, Dp - D)))
        weight = jnp.pad(weight, ((0, 0), (0, Dp - D)))

    gi = pl.cdiv(B, tm)
    gj = pl.cdiv(OUT, tn)
    gk = Dp // tk

    in_bytes = jnp.dtype(x0.dtype).itemsize
    cost = pl.CostEstimate(
        flops=2 * B * OUT * D,
        transcendentals=0,
        bytes_accessed=int(OUT * Dp * in_bytes * gi   # weight stream per batch block
                           + B * Dp * in_bytes * gj
                           + B * OUT * jnp.dtype(out_dtype).itemsize
                           + OUT * 4),
    )

    if gk == 1:
        # Fast path: single K tile -> no reduction axis, no accumulator, no
        # pl.when predication.
        out = pl.pallas_call(
            _cls_head_kernel_single_k,
            out_shape=jax.ShapeDtypeStruct((B, OUT), out_dtype),
            grid_spec=pltpu.PrefetchScalarGridSpec(
                num_scalar_prefetch=0,
                grid=(gi, gj),
                in_specs=[
                    pl.BlockSpec((tm, tk), lambda i, j: (i, 0)),   # CLS acts
                    pl.BlockSpec((tn, tk), lambda i, j: (j, 0)),   # weight
                    pl.BlockSpec((1, tn), lambda i, j: (0, j)),    # bias
                ],
                out_specs=pl.BlockSpec((tm, tn), lambda i, j: (i, j)),
            ),
            compiler_params=pltpu.CompilerParams(
                dimension_semantics=("parallel", "parallel"),
                vmem_limit_bytes=vmem_limit),
            cost_estimate=cost,
        )(x0, weight, bias_2d)
    else:
        out = pl.pallas_call(
            _cls_head_kernel_multi_k,
            out_shape=jax.ShapeDtypeStruct((B, OUT), out_dtype),
            grid_spec=pltpu.PrefetchScalarGridSpec(
                num_scalar_prefetch=0,
                grid=(gi, gj, gk),
                in_specs=[
                    pl.BlockSpec((tm, tk), lambda i, j, k: (i, k)),
                    pl.BlockSpec((tn, tk), lambda i, j, k: (j, k)),
                    pl.BlockSpec((1, tn), lambda i, j, k: (0, j)),
                ],
                out_specs=pl.BlockSpec((tm, tn), lambda i, j, k: (i, j)),
                scratch_shapes=[pltpu.VMEM((tm, tn), jnp.float32)],
            ),
            compiler_params=pltpu.CompilerParams(
                dimension_semantics=("parallel", "parallel", "arbitrary"),
                vmem_limit_bytes=vmem_limit),
            cost_estimate=cost,
        )(x0, weight, bias_2d)

    return out


if __name__ == "__main__":
    # Small shapes consistent with the module's forward: (batch, seq, d_model).
    B, S, D, OUT = 2, 8, 32, 2

    key = jax.random.PRNGKey(0)
    kx, kw, kb = jax.random.split(key, 3)

    x = jax.random.normal(kx, (B, S, D), dtype=jnp.float32)
    # nn.init.normal_(weight, std=0.02)
    weight = 0.02 * jax.random.normal(kw, (OUT, D), dtype=jnp.float32)
    # nn.init.normal_(bias, 0) -> mean 0, default std 1
    bias = jax.random.normal(kb, (OUT,), dtype=jnp.float32)

    out = classification_head(x, weight, bias)
    out = jax.block_until_ready(out)

    # Pure-JAX reference of the same semantics.
    ref = x[:, 0, :] @ weight.T + bias
    assert out.shape == (B, OUT)
    assert jnp.allclose(out, ref, atol=1e-5, rtol=1e-5)

    print("KERNEL_OK")
</pallas_src>

<mosaic_0001>
module attributes {stable_mosaic.version = 11 : i64} {
  func.func @_cls_head_kernel_single_k(%arg0: i32, %arg1: i32, %arg2: memref<2x32xf32, #tpu.memory_space<vmem>>, %arg3: memref<2x32xf32, #tpu.memory_space<vmem>>, %arg4: memref<1x2xf32, #tpu.memory_space<vmem>>, %arg5: memref<2x2xf32, #tpu.memory_space<vmem>>) attributes {dimension_semantics = [#tpu.dimension_semantics<parallel>, #tpu.dimension_semantics<parallel>], iteration_bounds = array<i64: 1, 1>, scalar_prefetch = 0 : i64, scratch_operands = 0 : i64, tpu.core_type = #tpu.core_type<tc>, window_params = [{transform_indices = @transform_0, window_bounds = array<i64: 2, 32>}, {transform_indices = @transform_1, window_bounds = array<i64: 2, 32>}, {transform_indices = @transform_2, window_bounds = array<i64: 1, 2>}, {transform_indices = @transform_3, window_bounds = array<i64: 2, 2>}]} {
    %c0 = arith.constant 0 : index
    %c0_0 = arith.constant 0 : index
    %0 = vector.load %arg2[%c0, %c0_0] : memref<2x32xf32, #tpu.memory_space<vmem>>, vector<2x32xf32>
    %c0_1 = arith.constant 0 : index
    %c0_2 = arith.constant 0 : index
    %1 = vector.load %arg3[%c0_1, %c0_2] : memref<2x32xf32, #tpu.memory_space<vmem>>, vector<2x32xf32>
    %cst = arith.constant dense<0.000000e+00> : vector<2x2xf32>
    %2 = tpu.matmul %0, %1, %cst {dimension_numbers = #tpu.dot_dimension_numbers<[1], [1], [0], [0], [0, 0, 1, 0], [], []>} : vector<2x32xf32>, vector<2x32xf32>, vector<2x2xf32> -> vector<2x2xf32>
    %c0_3 = arith.constant 0 : index
    %c0_4 = arith.constant 0 : index
    %3 = vector.load %arg4[%c0_3, %c0_4] : memref<1x2xf32, #tpu.memory_space<vmem>>, vector<1x2xf32>
    %4 = vector.broadcast %3 : vector<1x2xf32> to vector<2x2xf32>
    %5 = arith.addf %2, %4 : vector<2x2xf32>
    %c0_5 = arith.constant 0 : index
    %c0_6 = arith.constant 0 : index
    %6 = vector.load %arg5[%c0_5, %c0_6] : memref<2x2xf32, #tpu.memory_space<vmem>>, vector<2x2xf32>
    tpu.vector_store %arg5[%c0_5, %c0_6], %5 {strides = array<i32>} : memref<2x2xf32, #tpu.memory_space<vmem>>, vector<2x2xf32>,
    return
  }
  func.func @transform_0(%arg0: i32, %arg1: i32) -> (i32, i32) {
    %c0_i32 = arith.constant 0 : i32
    %c0_i32_0 = arith.constant 0 : i32
    return %arg0, %c0_i32 : i32, i32
  }
  func.func @transform_1(%arg0: i32, %arg1: i32) -> (i32, i32) {
    %c0_i32 = arith.constant 0 : i32
    %c0_i32_0 = arith.constant 0 : i32
    return %arg1, %c0_i32 : i32, i32
  }
  func.func @transform_2(%arg0: i32, %arg1: i32) -> (i32, i32) {
    %c0_i32 = arith.constant 0 : i32
    %c0_i32_0 = arith.constant 0 : i32
    return %c0_i32, %arg1 : i32, i32
  }
  func.func @transform_3(%arg0: i32, %arg1: i32) -> (i32, i32) {
    %c0_i32 = arith.constant 0 : i32
    return %arg0, %arg1 : i32, i32
  }
}

</mosaic_0001>

<llo_original>
// kernel: tpu_custom_call.1
$region0: #{tpu_custom_call.1}
  #allocation0 [shape = 'u32[]', space=smem, size = 0x4, offset = 0x4, fixed_abs, tag = 'smem constant byte address 0x4 - core index']
  #allocation1 [shape = 'u32[72,128]{1,0:T(1,128)}', space=vmem, size = 0x9000, scoped, tag = 'internal scratch']
  %s0 = inlined_call_operand.hbm [shape: f32[2,32], index: 0, kind: input, shape index: {}]
  %s1 = inlined_call_operand.hbm [shape: f32[2,32], index: 1, kind: input, shape index: {}]
  %s2 = inlined_call_operand.vmem [shape: f32[1,2], index: 2, kind: input, shape index: {}]
  %s3 = inlined_call_operand.hbm [shape: f32[2,2], index: 3, kind: output, shape index: {}]
  %s4 = sld [smem:[#allocation0]]
  $region30: #{tpu_custom_call.1} parent=0
    _
  %s6 = ssub.s32 1, %s4
  %s7 = scalar_select 0, %s6, %s4
  $region1: #{tpu_custom_call.1} parent=0
    #allocation2 [shape = 'u8[1024]{0}', space=vmem, size = 0x400, scoped, tag = 'input window, operand 0, single buffered']
    #allocation3 [shape = 's32[1]{0}', space=sflag, size = 0x4, scoped, tag = 'scoped memory for tpu_custom_call.1']
    #allocation4 [shape = 's32[1]{0}', space=sflag, size = 0x4, scoped, tag = 'scoped memory for tpu_custom_call.1']
    #allocation5 [shape = 'u8[1024]{0}', space=vmem, size = 0x400, scoped, tag = 'input window, operand 1, single buffered']
    #allocation6 [shape = 's32[1]{0}', space=sflag, size = 0x4, scoped, tag = 'scoped memory for tpu_custom_call.1']
    #allocation7 [shape = 'u8[1024]{0}', space=vmem, size = 0x400, scoped, tag = 'output window, operand 0, single buffered']
    %8 = vsyncpa [#allocation3], 0
    %9 = vsyncpa [#allocation6], 0
    %10 = vsyncpa [#allocation4], 0
    // Predicated region
    $region2: #{tpu_custom_call.1} parent=1 // pred_check
      _
    $region3: #{tpu_custom_call.1} parent=1 // pred_check_branch
      %12 = sbr.rel (0) target = $region5
    $region4: #{tpu_custom_call.1} parent=1 // pred_region
      %14 = vsyncadd [#allocation3], 0
      %s16 = sshll.u32 %s0, 4
      %s17 = int_to_ptr.hbm [resolvable:$true] %s16
      %s18 = sshll.u32 [#allocation2], 4
      %s19 = int_to_ptr.vmem [resolvable:$true] %s18
      %21 = dma.hbm_to_vmem [thread:$0]  %s17, 32, %s19, [#allocation3]
    $region5: #{tpu_custom_call.1} parent=1 // pred_fallthru
      _
    // Predicated region
    $region6: #{tpu_custom_call.1} parent=1 // pred_check
      _
    $region7: #{tpu_custom_call.1} parent=1 // pred_check_branch
      %23 = sbr.rel (0) target = $region9
    $region8: #{tpu_custom_call.1} parent=1 // pred_region
      %25 = vsyncadd [#allocation6], 0
      %s27 = sshll.u32 %s1, 4
      %s28 = int_to_ptr.hbm [resolvable:$true] %s27
      %s29 = sshll.u32 [#allocation5], 4
      %s30 = int_to_ptr.vmem [resolvable:$true] %s29
      %32 = dma.hbm_to_vmem [thread:$0]  %s28, 32, %s30, [#allocation6]
    $region9: #{tpu_custom_call.1} parent=1 // pred_fallthru
      _
    // Predicated region
    $region10: #{tpu_custom_call.1} parent=1 // pred_check
      _
    $region11: #{tpu_custom_call.1} parent=1 // pred_check_branch
      %34 = sbr.rel (0) target = $region13
    $region12: #{tpu_custom_call.1} parent=1 // pred_region
      _
    $region13: #{tpu_custom_call.1} parent=1 // pred_fallthru
      _
    // Predicated region
    $region14: #{tpu_custom_call.1} parent=1 // pred_check
      _
    $region15: #{tpu_custom_call.1} parent=1 // pred_check_branch
      %36 = sbr.rel (0) target = $region17
    $region16: #{tpu_custom_call.1} parent=1 // pred_region
      %38 = dma.done [#allocation3], 32
    $region17: #{tpu_custom_call.1} parent=1 // pred_fallthru
      _
    // Predicated region
    $region18: #{tpu_custom_call.1} parent=1 // pred_check
      _
    $region19: #{tpu_custom_call.1} parent=1 // pred_check_branch
      %40 = sbr.rel (0) target = $region21
    $region20: #{tpu_custom_call.1} parent=1 // pred_region
      %42 = dma.done [#allocation6], 32
    $region21: #{tpu_custom_call.1} parent=1 // pred_fallthru
      _
    %v43 = vld [vmem:[#allocation2] sm:$0x3]
    %v44 = vld [vmem:[#allocation5] sm:$0x3]
    %v45 = vld [vmem:[%s2] sm:$0x1]
    %v47 = vperm.slane %v45, 0
    %vm49 = vcmask 261120
    %v51 = vsel %vm49, %v43, 0
    %v54 = vsel %vm49, %v44, 0
    %56 = vmatpush.xpose.msra.mxu0 0.0
    %57 = vmatpush.xpose.msra.mxu0 0.0
    %58 = vmatpush.xpose.msra.mxu0 0.0
    %59 = vmatpush.xpose.msra.mxu0 0.0
    %60 = vmatpush.xpose.msra.mxu0 0.0
    %61 = vmatpush.xpose.msra.mxu0 0.0
    %62 = vmatpush.xpose.msra.mxu0 0.0
    %63 = vmatpush.xpose.msra.mxu0 0.0
    %64 = vmatpush.xpose.msra.mxu0 0.0
    %65 = vmatpush.xpose.msra.mxu0 0.0
    %66 = vmatpush.xpose.msra.mxu0 0.0
    %67 = vmatpush.xpose.msra.mxu0 0.0
    %68 = vmatpush.xpose.msra.mxu0 0.0
    %69 = vmatpush.xpose.msra.mxu0 0.0
    %70 = vmatpush.xpose.msra.mxu0 0.0
    %71 = vmatpush.xpose.msra.mxu0 %v54
    %72 = vmatmul.f32.gmra.mxu0 %v51
    %v73 = vpop.f32.mrf.mxu0
    %v74 = vadd.f32 %v47, %v73
    %75 = vdwg.mxu0
    %vm76 = vcmask 9216
    %77 = vst.msk [vmem:[#allocation7] sm:$0x3] %vm76, %v74
    // Predicated region
    $region22: #{tpu_custom_call.1} parent=1 // pred_check
      _
    $region23: #{tpu_custom_call.1} parent=1 // pred_check_branch
      %79 = sbr.rel (0) target = $region25
    $region24: #{tpu_custom_call.1} parent=1 // pred_region
      %81 = vsyncadd [#allocation4], 0
      %s83 = sshll.u32 [#allocation7], 4
      %s84 = int_to_ptr.vmem [resolvable:$true] %s83
      %s85 = sshll.u32 %s3, 4
      %s86 = int_to_ptr.hbm [resolvable:$true] %s85
      %88 = dma.vmem_to_hbm [thread:$0]  %s84, 32, %s86, [#allocation4]
    $region25: #{tpu_custom_call.1} parent=1 // pred_fallthru
      _
    // Predicated region
    $region26: #{tpu_custom_call.1} parent=1 // pred_check
      _
    $region27: #{tpu_custom_call.1} parent=1 // pred_check_branch
      %90 = sbr.rel (0) target = $region29
    $region28: #{tpu_custom_call.1} parent=1 // pred_region
      %92 = dma.done [#allocation4], 32
    $region29: #{tpu_custom_call.1} parent=1 // pred_fallthru
      _
    %93 = vsyncpa [#allocation3], 1
    %94 = vsyncpa [#allocation6], 1
    %95 = vsyncpa [#allocation4], 1

</llo_original>
